<compile_context>
chip_gen: v7x
topology: tpu7x:2x2x1
jax: 0.10.0
libtpu: 0.0.40
codegen_flags: <defaults>
</compile_context>

<pallas_src>
import functools
import math

import jax
import jax.numpy as jnp
from jax.experimental import pallas as pl
from jax.experimental.pallas import tpu as pltpu


# ----------------------------------------------------------------------------
# Fused CIN kernel: one grid step = one batch tile; all layers + fused FC dot.
# Activations live in a lane-dense (rows, L) layout with L = tb*D, lane = b*D+d.
# ----------------------------------------------------------------------------
def _cin_fused_kernel(x_ref, *refs, num_fields, layer_dims, compute_dtype):
    nl = len(layer_dims)
    w_refs = refs[0:nl]                 # (Hp_i, M*Np_i)   compute dtype
    b_refs = refs[nl:2 * nl]            # (Hp_i, 1)        f32
    fcw_refs = refs[2 * nl:3 * nl]      # (C, hxp_i)       f32
    out_ref = refs[3 * nl]              # (C, L)           f32
    slab_ref = refs[3 * nl + 1]         # (Kmax, L)        compute dtype, VMEM scratch

    M = num_fields
    xh = x_ref[...]                     # (Mp, L); rows >= M are zero padding
    h = xh                              # layer-0 h (already padded to Np_0 = Mp rows)

    # Accumulate the fused FC directly into the output block (each grid step owns
    # its own out block, so a straight-line init is safe).
    out_ref[...] = jnp.zeros_like(out_ref)

    for i in range(nl):
        Np, hxp, h_off = layer_dims[i]
        Kp = M * Np

        # Outer-product slab written straight into VMEM scratch (no concatenate).
        # Padded h rows are zero, so padded slab rows are zero automatically.
        for mf in range(M):
            slab_ref[mf * Np:(mf + 1) * Np, :] = h * xh[mf:mf + 1, :]

        # conv1d(kernel_size=1) == ONE MXU matmul over K = M*Np (aligned),
        # f32 accumulation; bias + ReLU are cheap VPU ops.
        z = jnp.dot(w_refs[i][...], slab_ref[0:Kp, :],
                    preferred_element_type=jnp.float32)          # (Hp, L) f32
        z = jnp.maximum(z + b_refs[i][...], 0.0)

        # Fused final-FC contribution (C is tiny; MXU drain is negligible here).
        out_ref[...] += jnp.dot(fcw_refs[i][...], z[0:hxp, :],
                                preferred_element_type=jnp.float32)

        if i + 1 < nl:
            np_next = layer_dims[i + 1][0]
            # Aligned slice (h_off, np_next are sublane multiples) -> zero-cost view.
            h = z[h_off:h_off + np_next, :].astype(compute_dtype)


# ----------------------------------------------------------------------------
# Wrapper: batch-tile sizing, VMEM budgeting, pallas_call plumbing, epilogue.
# ----------------------------------------------------------------------------
def cin_forward(x, mdl, block_b=None):
    """x: (B, num_fields, embed_dim) -> (B, num_classes)."""
    B, M, D = x.shape
    assert M == mdl.dim_in
    nl = mdl.num_layers
    C = mdl.num_classes
    cdt = mdl.compute_dtype
    cb = jnp.dtype(cdt).itemsize
    Mp, Kmax, Hmax = mdl.Mp, mdl.Kmax, mdl.Hmax

    # ---- batch-tile size: lane alignment + VMEM budget + >=2 tiles if possible.
    step = 128 // math.gcd(D, 128)          # tb granularity so L = tb*D is 128-aligned
    try:
        cap = getattr(pltpu.get_tpu_info(), "vmem_capacity_bytes", None)
    except Exception:
        cap = None
    if not cap:
        cap = 64 * 1024 * 1024              # conservative fallback (v7x per-core VMEM)
    vmem_limit = min(int(cap * 3) // 4, 100 * 1024 * 1024)

    weight_bytes = sum(int(a.size) * a.dtype.itemsize
                       for a in (*mdl.w_pads, *mdl.b_pads, *mdl.fcw_pads))
    # Bytes that scale with L = tb*D: x block (double-buffered) + loaded copy,
    # slab scratch, z/h live values (f32), out block (double-buffered).
    per_l = cb * (3 * Mp + Kmax) + 4 * (2 * Hmax + 2 * C + 2)
    budget = max(0, vmem_limit // 2 - weight_bytes)
    lane_cap = max(step, 8192 // max(D, 1))
    tb_budget = budget // (per_l * D)
    tb_budget = min(tb_budget, lane_cap)
    tb_budget = max(step, (tb_budget // step) * step)

    if block_b is not None:
        tb_want = max(1, int(block_b))
    else:
        tb_want = tb_budget
        # Prefer >= 2 batch tiles (v7x dual-TC / megacore) when the batch allows it.
        half = ((B // 2) // step) * step
        if half >= step:
            tb_want = min(tb_want, half)

    if B <= tb_want or B <= step:
        tb = B                               # single tile: block dims == full dims
    else:
        tb = max(step, (min(tb_want, B) // step) * step)
    bp = -(-B // tb) * tb
    L = tb * D
    grid = (bp // tb,)

    # (B, M, D) -> (Mp, bp*D): lane index = b*D + d.  Cast to compute dtype first so
    # the relayout moves half the bytes when compute_dtype is bf16.
    # TODO(synk): this transpose is one extra HBM round trip of x; if the producer can
    # keep activations in (M, B*D) layout this prologue disappears entirely.
    x_r = jnp.transpose(x.astype(cdt), (1, 0, 2)).reshape(M, B * D)
    x_r = jnp.pad(x_r, ((0, Mp - M), (0, (bp - B) * D)))

    # Constant-per-grid-step inputs (weights/biases/fc slices): whole-array VMEM
    # residents -> single-buffered, DMA'd once.
    const_spec = pl.BlockSpec(memory_space=pltpu.MemorySpace.VMEM)
    in_specs = [pl.BlockSpec((Mp, L), lambda i: (0, i))] + [const_spec] * (3 * nl)

    flops = sum(2 * w.shape[0] * w.shape[1] for w in mdl.w_pads) * bp * D
    flops += sum(2 * C * fw.shape[1] for fw in mdl.fcw_pads) * bp * D
    bytes_accessed = (int(x_r.size) * x_r.dtype.itemsize + weight_bytes
                      + C * bp * D * 4)

    kernel = functools.partial(
        _cin_fused_kernel,
        num_fields=M, layer_dims=tuple(mdl.layer_dims), compute_dtype=cdt)

    g = pl.pallas_call(
        kernel,
        out_shape=jax.ShapeDtypeStruct((C, bp * D), jnp.float32),
        grid=grid,
        in_specs=in_specs,
        out_specs=pl.BlockSpec((C, L), lambda i: (0, i)),
        scratch_shapes=[pltpu.VMEM((Kmax, L), cdt)],
        compiler_params=pltpu.CompilerParams(
            dimension_semantics=("parallel",),
            vmem_limit_bytes=int(vmem_limit)),
        cost_estimate=pl.CostEstimate(flops=int(flops), transcendentals=0,
                                      bytes_accessed=int(bytes_accessed)),
    )(x_r, *mdl.w_pads, *mdl.b_pads, *mdl.fcw_pads)

    # Tiny epilogue left to XLA: sum over embed dim D, drop batch padding, fc bias.
    f = g.reshape(C, bp, D).sum(axis=-1)            # (C, bp)
    return f[:, :B].T + mdl.fc_b                    # (B, C)


# ----------------------------------------------------------------------------
# Module (deterministic synthetic parameters, pre-padded for the kernel)
# ----------------------------------------------------------------------------
class CompressedInteractionNetwork:
    def __init__(self, dim_in, dim_hiddens, num_classes=1, split_half=True,
                 bias=True, key=None, compute_dtype=jnp.bfloat16):
        dims = list(dim_hiddens)
        self.num_layers = len(dims)
        self.split_half = split_half
        self.num_classes = num_classes
        self.compute_dtype = compute_dtype
        self.dim_in = dim_in
        key = jax.random.PRNGKey(0) if key is None else key

        cb = jnp.dtype(compute_dtype).itemsize
        S = max(8, 32 // cb)            # sublane rows: 8 for f32, 16 for bf16
        self._sub = S

        def rup(a):
            return ((a + S - 1) // S) * S

        M = dim_in
        Mp = rup(M)
        self.Mp = Mp

        # original (torch-equivalent) parameters, for the reference
        self._conv_ws_2d, self._conv_bs = [], []
        # padded parameters consumed by the kernel
        self.w_pads, self.b_pads, self.fcw_pads = [], [], []
        self.layer_dims = []            # per layer: (Np, hxp, h_off)

        prev_real, prev_pad = M, Mp     # h rows entering layer i (real / padded)
        fc_dim_in = 0
        hx_list, hxp_list, Hp_list = [], [], []

        for i in range(self.num_layers):
            H = dims[i]
            in_ch = M * prev_real
            key, k1, k2 = jax.random.split(key, 3)
            # nn.Conv1d(in_ch, H, 1): weight (H, in_ch, 1) -> (H, in_ch), bias (H,)
            w2d = jax.random.normal(k1, (H, in_ch), jnp.float32) * 0.1
            bvec = (jax.random.normal(k2, (H,), jnp.float32) * 0.1
                    if bias else jnp.zeros((H,), jnp.float32))
            self._conv_ws_2d.append(w2d)
            self._conv_bs.append(bvec)

            last = (i == self.num_layers - 1)
            if split_half and not last:
                hx = H // 2                      # first half -> FC, second half -> h
                h_real = H - hx
                hxp = rup(hx)
                Hp = hxp + rup(h_real)
                h_off = hxp
            else:
                hx = H                           # whole z -> FC (and -> h if not last)
                h_real = H
                hxp = rup(H)
                Hp = hxp
                h_off = 0

            Np = prev_pad
            # Padded conv weight (Hp, M*Np): rows rearranged so both split halves
            # start at sublane-aligned offsets; columns grouped per field m with
            # n padded to Np; padding rows/cols are zero.
            w3 = w2d.reshape(H, M, prev_real)
            w3p = jnp.zeros((Hp, M, Np), jnp.float32)
            w3p = w3p.at[0:hx, :, 0:prev_real].set(w3[0:hx])
            if split_half and not last:
                w3p = w3p.at[hxp:hxp + h_real, :, 0:prev_real].set(w3[hx:])
            self.w_pads.append(w3p.reshape(Hp, M * Np).astype(compute_dtype))

            # Padded bias (Hp, 1): padding rows MUST be zero so relu(0)=0 for them.
            bpad = jnp.zeros((Hp,), jnp.float32).at[0:hx].set(bvec[0:hx])
            if split_half and not last:
                bpad = bpad.at[hxp:hxp + h_real].set(bvec[hx:])
            self.b_pads.append(bpad.reshape(Hp, 1))

            self.layer_dims.append((Np, hxp, h_off))
            hx_list.append(hx)
            hxp_list.append(hxp)
            Hp_list.append(Hp)
            fc_dim_in += hx

            if split_half and not last:
                prev_real, prev_pad = h_real, rup(h_real)
            else:
                prev_real, prev_pad = H, Hp

        self.fc_dim_in = fc_dim_in
        key, k1, k2 = jax.random.split(key, 3)
        self.fc_w = jax.random.normal(k1, (fc_dim_in, num_classes), jnp.float32) * 0.1
        self.fc_b = (jax.random.normal(k2, (1, num_classes), jnp.float32) * 0.1
                     if bias else jnp.zeros((1, num_classes), jnp.float32))

        # Per-layer transposed, column-padded slices of fc_w for the fused FC dot.
        off = 0
        for hx, hxp in zip(hx_list, hxp_list):
            fw = jnp.zeros((num_classes, hxp), jnp.float32)
            fw = fw.at[:, 0:hx].set(self.fc_w[off:off + hx, :].T)
            self.fcw_pads.append(fw)
            off += hx

        self.Kmax = max(dim_in * ld[0] for ld in self.layer_dims)
        self.Hmax = max(Hp_list)

    def __call__(self, x, block_b=None):
        # x: (B, num_fields, embed_dim) -> (B, num_classes)
        return cin_forward(x, self, block_b=block_b)


# ----------------------------------------------------------------------------
# Pure-JAX reference (uses the original, unpadded parameters)
# ----------------------------------------------------------------------------
def reference_forward(x, model):
    xs = []
    x0, h = x, x
    for i in range(model.num_layers):
        o = jnp.einsum('bmd,bnd->bmnd', x0, h)
        B = o.shape[0]
        o = o.reshape(B, -1, o.shape[-1])
        z = (jnp.einsum('oc,bcd->bod', model._conv_ws_2d[i], o)
             + model._conv_bs[i][None, :, None])
        z = jnp.maximum(z, 0.0)
        if model.split_half and i != model.num_layers - 1:
            half = z.shape[1] // 2
            xpart, h = z[:, :half], z[:, half:]
        else:
            xpart, h = z, z
        xs.append(xpart)
    f = jnp.sum(jnp.concatenate(xs, axis=1), axis=2)
    return f @ model.fc_w + model.fc_b


if __name__ == "__main__":
    key = jax.random.PRNGKey(0)
    kx, kp, kx2 = jax.random.split(key, 3)

    num_fields, embed_dim = 4, 16

    # --- f32 compute path (strict tolerance; also exercises S=8 padding). ---
    model_f32 = CompressedInteractionNetwork(
        dim_in=num_fields, dim_hiddens=[8, 6], num_classes=1,
        split_half=True, bias=True, key=kp, compute_dtype=jnp.float32)
    x = jax.random.normal(kx, (2, num_fields, embed_dim), jnp.float32)
    out = jax.block_until_ready(model_f32(x))
    ref = reference_forward(x, model_f32)
    assert out.shape == (2, 1), out.shape
    assert jnp.allclose(out, ref, atol=1e-3, rtol=1e-3), (out, ref)

    # --- bf16 default path, multi-tile batch (B=20, tile=8 -> grid of 3). ---
    model_bf16 = CompressedInteractionNetwork(
        dim_in=num_fields, dim_hiddens=[8, 6], num_classes=1,
        split_half=True, bias=True, key=kp)          # compute_dtype=bf16 default
    x2 = jax.random.normal(kx2, (20, num_fields, embed_dim), jnp.float32)
    out2 = jax.block_until_ready(model_bf16(x2, block_b=8))
    ref2 = reference_forward(x2, model_bf16)
    assert out2.shape == (20, 1), out2.shape
    assert jnp.allclose(out2, ref2, atol=5e-2, rtol=5e-2), (out2, ref2)

    # --- bf16 single-tile path with automatic (budget-based) tile selection. ---
    out3 = jax.block_until_ready(model_bf16(x))
    ref3 = reference_forward(x, model_bf16)
    assert out3.shape == (2, 1), out3.shape
    assert jnp.allclose(out3, ref3, atol=5e-2, rtol=5e-2), (out3, ref3)

    print("KERNEL_OK")
</pallas_src>

<mosaic_0001>
module attributes {stable_mosaic.version = 11 : i64} {
  func.func @_cin_fused_kernel(%arg0: i32, %arg1: memref<8x32xf32, #tpu.memory_space<vmem>>, %arg2: memref<16x32xf32, #tpu.memory_space<vmem>>, %arg3: memref<8x32xf32, #tpu.memory_space<vmem>>, %arg4: memref<16x1xf32, #tpu.memory_space<vmem>>, %arg5: memref<8x1xf32, #tpu.memory_space<vmem>>, %arg6: memref<1x8xf32, #tpu.memory_space<vmem>>, %arg7: memref<1x8xf32, #tpu.memory_space<vmem>>, %arg8: memref<1x32xf32, #tpu.memory_space<vmem>>, %arg9: memref<32x32xf32, #tpu.memory_space<vmem>>) attributes {dimension_semantics = [#tpu.dimension_semantics<parallel>], iteration_bounds = array<i64: 1>, scalar_prefetch = 0 : i64, scratch_operands = 1 : i64, tpu.core_type = #tpu.core_type<tc>, window_params = [{transform_indices = @transform_0, window_bounds = array<i64: 8, 32>}, {pipeline_mode = #tpu.pipeline_mode<synchronous>, transform_indices = @transform_1, window_bounds = array<i64: 16, 32>}, {pipeline_mode = #tpu.pipeline_mode<synchronous>, transform_indices = @transform_2, window_bounds = array<i64: 8, 32>}, {pipeline_mode = #tpu.pipeline_mode<synchronous>, transform_indices = @transform_3, window_bounds = array<i64: 16, 1>}, {pipeline_mode = #tpu.pipeline_mode<synchronous>, transform_indices = @transform_4, window_bounds = array<i64: 8, 1>}, {pipeline_mode = #tpu.pipeline_mode<synchronous>, transform_indices = @transform_5, window_bounds = array<i64: 1, 8>}, {pipeline_mode = #tpu.pipeline_mode<synchronous>, transform_indices = @transform_6, window_bounds = array<i64: 1, 8>}, {transform_indices = @transform_7, window_bounds = array<i64: 1, 32>}]} {
    %c0 = arith.constant 0 : index
    %c0_0 = arith.constant 0 : index
    %0 = vector.load %arg1[%c0, %c0_0] : memref<8x32xf32, #tpu.memory_space<vmem>>, vector<8x32xf32>
    %cst = arith.constant 0.000000e+00 : f32
    %1 = vector.broadcast %cst : f32 to vector<1x32xf32>
    %c0_1 = arith.constant 0 : index
    %c0_2 = arith.constant 0 : index
    %2 = vector.load %arg8[%c0_1, %c0_2] : memref<1x32xf32, #tpu.memory_space<vmem>>, vector<1x32xf32>
    tpu.vector_store %arg8[%c0_1, %c0_2], %1 {strides = array<i32>} : memref<1x32xf32, #tpu.memory_space<vmem>>, vector<1x32xf32>,
    %3 = vector.extract_strided_slice %0 {offsets = [0, 0], sizes = [1, 32], strides = [1, 1]} : vector<8x32xf32> to vector<1x32xf32>
    %4 = vector.broadcast %3 : vector<1x32xf32> to vector<8x32xf32>
    %5 = arith.mulf %0, %4 : vector<8x32xf32>
    %c0_3 = arith.constant 0 : index
    %c0_4 = arith.constant 0 : index
    %6 = vector.load %arg9[%c0_3, %c0_4] : memref<32x32xf32, #tpu.memory_space<vmem>>, vector<8x32xf32>
    tpu.vector_store %arg9[%c0_3, %c0_4], %5 {strides = array<i32>} : memref<32x32xf32, #tpu.memory_space<vmem>>, vector<8x32xf32>,
    %7 = vector.extract_strided_slice %0 {offsets = [1, 0], sizes = [1, 32], strides = [1, 1]} : vector<8x32xf32> to vector<1x32xf32>
    %8 = vector.broadcast %7 : vector<1x32xf32> to vector<8x32xf32>
    %9 = arith.mulf %0, %8 : vector<8x32xf32>
    %c8 = arith.constant 8 : index
    %c0_5 = arith.constant 0 : index
    %10 = vector.load %arg9[%c8, %c0_5] : memref<32x32xf32, #tpu.memory_space<vmem>>, vector<8x32xf32>
    tpu.vector_store %arg9[%c8, %c0_5], %9 {strides = array<i32>} : memref<32x32xf32, #tpu.memory_space<vmem>>, vector<8x32xf32>,
    %11 = vector.extract_strided_slice %0 {offsets = [2, 0], sizes = [1, 32], strides = [1, 1]} : vector<8x32xf32> to vector<1x32xf32>
    %12 = vector.broadcast %11 : vector<1x32xf32> to vector<8x32xf32>
    %13 = arith.mulf %0, %12 : vector<8x32xf32>
    %c16 = arith.constant 16 : index
    %c0_6 = arith.constant 0 : index
    %14 = vector.load %arg9[%c16, %c0_6] : memref<32x32xf32, #tpu.memory_space<vmem>>, vector<8x32xf32>
    tpu.vector_store %arg9[%c16, %c0_6], %13 {strides = array<i32>} : memref<32x32xf32, #tpu.memory_space<vmem>>, vector<8x32xf32>,
    %15 = vector.extract_strided_slice %0 {offsets = [3, 0], sizes = [1, 32], strides = [1, 1]} : vector<8x32xf32> to vector<1x32xf32>
    %16 = vector.broadcast %15 : vector<1x32xf32> to vector<8x32xf32>
    %17 = arith.mulf %0, %16 : vector<8x32xf32>
    %c24 = arith.constant 24 : index
    %c0_7 = arith.constant 0 : index
    %18 = vector.load %arg9[%c24, %c0_7] : memref<32x32xf32, #tpu.memory_space<vmem>>, vector<8x32xf32>
    tpu.vector_store %arg9[%c24, %c0_7], %17 {strides = array<i32>} : memref<32x32xf32, #tpu.memory_space<vmem>>, vector<8x32xf32>,
    %c0_8 = arith.constant 0 : index
    %c0_9 = arith.constant 0 : index
    %19 = vector.load %arg2[%c0_8, %c0_9] : memref<16x32xf32, #tpu.memory_space<vmem>>, vector<16x32xf32>
    %c0_10 = arith.constant 0 : index
    %c0_11 = arith.constant 0 : index
    %20 = vector.load %arg9[%c0_10, %c0_11] : memref<32x32xf32, #tpu.memory_space<vmem>>, vector<32x32xf32>
    %cst_12 = arith.constant dense<0.000000e+00> : vector<16x32xf32>
    %21 = tpu.matmul %19, %20, %cst_12 {dimension_numbers = #tpu.dot_dimension_numbers<[1], [0], [0], [1], [0, 0, 1, 1], [], []>} : vector<16x32xf32>, vector<32x32xf32>, vector<16x32xf32> -> vector<16x32xf32>
    %c0_13 = arith.constant 0 : index
    %c0_14 = arith.constant 0 : index
    %22 = vector.load %arg4[%c0_13, %c0_14] : memref<16x1xf32, #tpu.memory_space<vmem>>, vector<16x1xf32>
    %23 = vector.broadcast %22 : vector<16x1xf32> to vector<16x32xf32>
    %24 = arith.addf %21, %23 : vector<16x32xf32>
    %cst_15 = arith.constant 0.000000e+00 : f32
    %25 = vector.broadcast %cst_15 : f32 to vector<16x32xf32>
    %26 = arith.maximumf %24, %25 : vector<16x32xf32>
    %c0_16 = arith.constant 0 : index
    %c0_17 = arith.constant 0 : index
    %27 = vector.load %arg8[%c0_16, %c0_17] : memref<1x32xf32, #tpu.memory_space<vmem>>, vector<1x32xf32>
    %c0_18 = arith.constant 0 : index
    %c0_19 = arith.constant 0 : index
    %28 = vector.load %arg6[%c0_18, %c0_19] : memref<1x8xf32, #tpu.memory_space<vmem>>, vector<1x8xf32>
    %29 = vector.extract_strided_slice %26 {offsets = [0, 0], sizes = [8, 32], strides = [1, 1]} : vector<16x32xf32> to vector<8x32xf32>
    %cst_20 = arith.constant dense<0.000000e+00> : vector<1x32xf32>
    %30 = tpu.matmul %28, %29, %cst_20 {dimension_numbers = #tpu.dot_dimension_numbers<[1], [0], [0], [1], [0, 0, 1, 1], [], []>} : vector<1x8xf32>, vector<8x32xf32>, vector<1x32xf32> -> vector<1x32xf32>
    %31 = arith.addf %27, %30 : vector<1x32xf32>
    %c0_21 = arith.constant 0 : index
    %c0_22 = arith.constant 0 : index
    %32 = vector.load %arg8[%c0_21, %c0_22] : memref<1x32xf32, #tpu.memory_space<vmem>>, vector<1x32xf32>
    tpu.vector_store %arg8[%c0_21, %c0_22], %31 {strides = array<i32>} : memref<1x32xf32, #tpu.memory_space<vmem>>, vector<1x32xf32>,
    %33 = vector.extract_strided_slice %26 {offsets = [8, 0], sizes = [8, 32], strides = [1, 1]} : vector<16x32xf32> to vector<8x32xf32>
    %34 = vector.extract_strided_slice %0 {offsets = [0, 0], sizes = [1, 32], strides = [1, 1]} : vector<8x32xf32> to vector<1x32xf32>
    %35 = vector.broadcast %34 : vector<1x32xf32> to vector<8x32xf32>
    %36 = arith.mulf %33, %35 : vector<8x32xf32>
    %c0_23 = arith.constant 0 : index
    %c0_24 = arith.constant 0 : index
    %37 = vector.load %arg9[%c0_23, %c0_24] : memref<32x32xf32, #tpu.memory_space<vmem>>, vector<8x32xf32>
    tpu.vector_store %arg9[%c0_23, %c0_24], %36 {strides = array<i32>} : memref<32x32xf32, #tpu.memory_space<vmem>>, vector<8x32xf32>,
    %38 = vector.extract_strided_slice %0 {offsets = [1, 0], sizes = [1, 32], strides = [1, 1]} : vector<8x32xf32> to vector<1x32xf32>
    %39 = vector.broadcast %38 : vector<1x32xf32> to vector<8x32xf32>
    %40 = arith.mulf %33, %39 : vector<8x32xf32>
    %c8_25 = arith.constant 8 : index
    %c0_26 = arith.constant 0 : index
    %41 = vector.load %arg9[%c8_25, %c0_26] : memref<32x32xf32, #tpu.memory_space<vmem>>, vector<8x32xf32>
    tpu.vector_store %arg9[%c8_25, %c0_26], %40 {strides = array<i32>} : memref<32x32xf32, #tpu.memory_space<vmem>>, vector<8x32xf32>,
    %42 = vector.extract_strided_slice %0 {offsets = [2, 0], sizes = [1, 32], strides = [1, 1]} : vector<8x32xf32> to vector<1x32xf32>
    %43 = vector.broadcast %42 : vector<1x32xf32> to vector<8x32xf32>
    %44 = arith.mulf %33, %43 : vector<8x32xf32>
    %c16_27 = arith.constant 16 : index
    %c0_28 = arith.constant 0 : index
    %45 = vector.load %arg9[%c16_27, %c0_28] : memref<32x32xf32, #tpu.memory_space<vmem>>, vector<8x32xf32>
    tpu.vector_store %arg9[%c16_27, %c0_28], %44 {strides = array<i32>} : memref<32x32xf32, #tpu.memory_space<vmem>>, vector<8x32xf32>,
    %46 = vector.extract_strided_slice %0 {offsets = [3, 0], sizes = [1, 32], strides = [1, 1]} : vector<8x32xf32> to vector<1x32xf32>
    %47 = vector.broadcast %46 : vector<1x32xf32> to vector<8x32xf32>
    %48 = arith.mulf %33, %47 : vector<8x32xf32>
    %c24_29 = arith.constant 24 : index
    %c0_30 = arith.constant 0 : index
    %49 = vector.load %arg9[%c24_29, %c0_30] : memref<32x32xf32, #tpu.memory_space<vmem>>, vector<8x32xf32>
    tpu.vector_store %arg9[%c24_29, %c0_30], %48 {strides = array<i32>} : memref<32x32xf32, #tpu.memory_space<vmem>>, vector<8x32xf32>,
    %c0_31 = arith.constant 0 : index
    %c0_32 = arith.constant 0 : index
    %50 = vector.load %arg3[%c0_31, %c0_32] : memref<8x32xf32, #tpu.memory_space<vmem>>, vector<8x32xf32>
    %c0_33 = arith.constant 0 : index
    %c0_34 = arith.constant 0 : index
    %51 = vector.load %arg9[%c0_33, %c0_34] : memref<32x32xf32, #tpu.memory_space<vmem>>, vector<32x32xf32>
    %cst_35 = arith.constant dense<0.000000e+00> : vector<8x32xf32>
    %52 = tpu.matmul %50, %51, %cst_35 {dimension_numbers = #tpu.dot_dimension_numbers<[1], [0], [0], [1], [0, 0, 1, 1], [], []>} : vector<8x32xf32>, vector<32x32xf32>, vector<8x32xf32> -> vector<8x32xf32>
    %c0_36 = arith.constant 0 : index
    %c0_37 = arith.constant 0 : index
    %53 = vector.load %arg5[%c0_36, %c0_37] : memref<8x1xf32, #tpu.memory_space<vmem>>, vector<8x1xf32>
    %54 = vector.broadcast %53 : vector<8x1xf32> to vector<8x32xf32>
    %55 = arith.addf %52, %54 : vector<8x32xf32>
    %cst_38 = arith.constant 0.000000e+00 : f32
    %56 = vector.broadcast %cst_38 : f32 to vector<8x32xf32>
    %57 = arith.maximumf %55, %56 : vector<8x32xf32>
    %c0_39 = arith.constant 0 : index
    %c0_40 = arith.constant 0 : index
    %58 = vector.load %arg8[%c0_39, %c0_40] : memref<1x32xf32, #tpu.memory_space<vmem>>, vector<1x32xf32>
    %c0_41 = arith.constant 0 : index
    %c0_42 = arith.constant 0 : index
    %59 = vector.load %arg7[%c0_41, %c0_42] : memref<1x8xf32, #tpu.memory_space<vmem>>, vector<1x8xf32>
    %cst_43 = arith.constant dense<0.000000e+00> : vector<1x32xf32>
    %60 = tpu.matmul %59, %57, %cst_43 {dimension_numbers = #tpu.dot_dimension_numbers<[1], [0], [0], [1], [0, 0, 1, 1], [], []>} : vector<1x8xf32>, vector<8x32xf32>, vector<1x32xf32> -> vector<1x32xf32>
    %61 = arith.addf %58, %60 : vector<1x32xf32>
    %c0_44 = arith.constant 0 : index
    %c0_45 = arith.constant 0 : index
    %62 = vector.load %arg8[%c0_44, %c0_45] : memref<1x32xf32, #tpu.memory_space<vmem>>, vector<1x32xf32>
    tpu.vector_store %arg8[%c0_44, %c0_45], %61 {strides = array<i32>} : memref<1x32xf32, #tpu.memory_space<vmem>>, vector<1x32xf32>,
    return
  }
  func.func @transform_0(%arg0: i32) -> (i32, i32) {
    %c0_i32 = arith.constant 0 : i32
    %c0_i32_0 = arith.constant 0 : i32
    return %c0_i32, %arg0 : i32, i32
  }
  func.func @transform_1(%arg0: i32) -> (i32, i32) {
    %c0_i32 = arith.constant 0 : i32
    %c0_i32_0 = arith.constant 0 : i32
    %c0_i32_1 = arith.constant 0 : i32
    return %c0_i32, %c0_i32_0 : i32, i32
  }
  func.func @transform_2(%arg0: i32) -> (i32, i32) {
    %c0_i32 = arith.constant 0 : i32
    %c0_i32_0 = arith.constant 0 : i32
    %c0_i32_1 = arith.constant 0 : i32
    return %c0_i32, %c0_i32_0 : i32, i32
  }
  func.func @transform_3(%arg0: i32) -> (i32, i32) {
    %c0_i32 = arith.constant 0 : i32
    %c0_i32_0 = arith.constant 0 : i32
    %c0_i32_1 = arith.constant 0 : i32
    return %c0_i32, %c0_i32_0 : i32, i32
  }
  func.func @transform_4(%arg0: i32) -> (i32, i32) {
    %c0_i32 = arith.constant 0 : i32
    %c0_i32_0 = arith.constant 0 : i32
    %c0_i32_1 = arith.constant 0 : i32
    return %c0_i32, %c0_i32_0 : i32, i32
  }
  func.func @transform_5(%arg0: i32) -> (i32, i32) {
    %c0_i32 = arith.constant 0 : i32
    %c0_i32_0 = arith.constant 0 : i32
    %c0_i32_1 = arith.constant 0 : i32
    return %c0_i32, %c0_i32_0 : i32, i32
  }
  func.func @transform_6(%arg0: i32) -> (i32, i32) {
    %c0_i32 = arith.constant 0 : i32
    %c0_i32_0 = arith.constant 0 : i32
    %c0_i32_1 = arith.constant 0 : i32
    return %c0_i32, %c0_i32_0 : i32, i32
  }
  func.func @transform_7(%arg0: i32) -> (i32, i32) {
    %c0_i32 = arith.constant 0 : i32
    %c0_i32_0 = arith.constant 0 : i32
    return %c0_i32, %arg0 : i32, i32
  }
}

</mosaic_0001>

<llo_original>
// kernel: tpu_custom_call.1
$region0: #{tpu_custom_call.1}
  #allocation0 [shape = 'u32[]', space=smem, size = 0x4, offset = 0x4, fixed_abs, tag = 'smem constant byte address 0x4 - core index']
  #allocation1 [shape = 'u32[144,128]{1,0:T(1,128)}', space=vmem, size = 0x12000, scoped, tag = 'internal scratch']
  #allocation2 [shape = 'f32[32,32]{1,0:T(8,128)}', space=vmem, size = 0x4000, scoped, tag = 'scratch operand']
  %s0 = inlined_call_operand.vmem [shape: f32[8,32], index: 0, kind: input, shape index: {}]
  %s1 = inlined_call_operand.vmem [shape: f32[16,32], index: 1, kind: input, shape index: {}]
  %s2 = inlined_call_operand.vmem [shape: f32[8,32], index: 2, kind: input, shape index: {}]
  %s3 = inlined_call_operand.vmem [shape: f32[16,1], index: 3, kind: input, shape index: {}]
  %s4 = inlined_call_operand.vmem [shape: f32[8,1], index: 4, kind: input, shape index: {}]
  %s5 = inlined_call_operand.vmem [shape: f32[1,8], index: 5, kind: input, shape index: {}]
  %s6 = inlined_call_operand.vmem [shape: f32[1,8], index: 6, kind: input, shape index: {}]
  %s7 = inlined_call_operand.hbm [shape: f32[1,32], index: 7, kind: output, shape index: {}]
  %s8 = sld [smem:[#allocation0]]
  $region38: #{tpu_custom_call.1} parent=0
    _
  %s10 = ssub.s32 1, %s8
  %s11 = scalar_select 0, %s10, %s8
  $region1: #{tpu_custom_call.1} parent=0
    #allocation3 [shape = 'u8[512]{0}', space=vmem, size = 0x400, scoped, tag = 'output window, operand 0, single buffered']
    #allocation4 [shape = 's32[1]{0}', space=sflag, size = 0x4, scoped, tag = 'scoped memory for tpu_custom_call.1']
    %12 = vsyncpa [#allocation4], 0
    // Predicated region
    $region2: #{tpu_custom_call.1} parent=1 // pred_check
      _
    $region3: #{tpu_custom_call.1} parent=1 // pred_check_branch
      %14 = sbr.rel (0) target = $region5
    $region4: #{tpu_custom_call.1} parent=1 // pred_region
      _
    $region5: #{tpu_custom_call.1} parent=1 // pred_fallthru
      _
    // Predicated region
    $region6: #{tpu_custom_call.1} parent=1 // pred_check
      _
    $region7: #{tpu_custom_call.1} parent=1 // pred_check_branch
      %16 = sbr.rel (0) target = $region9
    $region8: #{tpu_custom_call.1} parent=1 // pred_region
      _
    $region9: #{tpu_custom_call.1} parent=1 // pred_fallthru
      _
    // Predicated region
    $region10: #{tpu_custom_call.1} parent=1 // pred_check
      _
    $region11: #{tpu_custom_call.1} parent=1 // pred_check_branch
      %18 = sbr.rel (0) target = $region13
    $region12: #{tpu_custom_call.1} parent=1 // pred_region
      _
    $region13: #{tpu_custom_call.1} parent=1 // pred_fallthru
      _
    // Predicated region
    $region14: #{tpu_custom_call.1} parent=1 // pred_check
      _
    $region15: #{tpu_custom_call.1} parent=1 // pred_check_branch
      %20 = sbr.rel (0) target = $region17
    $region16: #{tpu_custom_call.1} parent=1 // pred_region
      _
    $region17: #{tpu_custom_call.1} parent=1 // pred_fallthru
      _
    // Predicated region
    $region18: #{tpu_custom_call.1} parent=1 // pred_check
      _
    $region19: #{tpu_custom_call.1} parent=1 // pred_check_branch
      %22 = sbr.rel (0) target = $region21
    $region20: #{tpu_custom_call.1} parent=1 // pred_region
      _
    $region21: #{tpu_custom_call.1} parent=1 // pred_fallthru
      _
    // Predicated region
    $region22: #{tpu_custom_call.1} parent=1 // pred_check
      _
    $region23: #{tpu_custom_call.1} parent=1 // pred_check_branch
      %24 = sbr.rel (0) target = $region25
    $region24: #{tpu_custom_call.1} parent=1 // pred_region
      _
    $region25: #{tpu_custom_call.1} parent=1 // pred_fallthru
      _
    // Predicated region
    $region26: #{tpu_custom_call.1} parent=1 // pred_check
      _
    $region27: #{tpu_custom_call.1} parent=1 // pred_check_branch
      %26 = sbr.rel (0) target = $region29
    $region28: #{tpu_custom_call.1} parent=1 // pred_region
      _
    $region29: #{tpu_custom_call.1} parent=1 // pred_fallthru
      _
    %v27 = vld [vmem:[%s0] sm:$0xff]
    %vm28 = vcmask 253952
    %29 = vst.msk [vmem:[#allocation3] sm:$0x1] %vm28, 0.0
    %v30 = vlaneseq
    %v31 = vshrl.u32 %v30, 7
    %v32 = vsub.s32 0, %v31
    %v33 = vrot.slane %v27, %v32
    %v34 = vmul.f32 %v27, %v33
    %vm35 = vcmask 261120
    %36 = vst.msk [vmem:[#allocation2] sm:$0xff] %vm35, %v34
    %v37 = vlaneseq
    %v38 = vshrl.u32 %v37, 7
    %v39 = vsub.s32 1, %v38
    %v40 = vrot.slane %v27, %v39
    %v41 = vmul.f32 %v27, %v40
    %42 = vst.msk [vmem:[#allocation2 + $0x8] sm:$0xff] %vm35, %v41
    %v43 = vlaneseq
    %v44 = vshrl.u32 %v43, 7
    %v45 = vsub.s32 2, %v44
    %v46 = vrot.slane %v27, %v45
    %v47 = vmul.f32 %v27, %v46
    %48 = vst.msk [vmem:[#allocation2 + $0x10] sm:$0xff] %vm35, %v47
    %v49 = vlaneseq
    %v50 = vshrl.u32 %v49, 7
    %v51 = vsub.s32 3, %v50
    %v52 = vrot.slane %v27, %v51
    %v53 = vmul.f32 %v27, %v52
    %54 = vst.msk [vmem:[#allocation2 + $0x18] sm:$0xff] %vm35, %v53
    %v55 = vld [vmem:[%s1] sm:$0xff]
    %v56 = vld [vmem:[%s1 + $0x8] sm:$0xff]
    %v57 = vld [vmem:[#allocation2] sm:$0xff]
    %v58 = vld [vmem:[#allocation2 + $0x8] sm:$0xff]
    %v59 = vld [vmem:[#allocation2 + $0x10] sm:$0xff]
    %v60 = vld [vmem:[#allocation2 + $0x18] sm:$0xff]
    %v61 = vld [vmem:[%s3] sm:$0xff]
    %v62 = vld [vmem:[%s3 + $0x8] sm:$0xff]
    %64 = vset.pattern.permute.xlu0 0
    %65 = vperm.xlu0 %64, %v61
    %v66 = vpop.permute.xlu0 %65
    %69 = vset.pattern.permute.xlu0 0
    %70 = vperm.xlu0 %69, %v62
    %v71 = vpop.permute.xlu0 %70
    %v74 = vsel %vm35, %v55, 0
    %v77 = vsel %vm35, %v56, 0
    %79 = vmatprep.subr.mxu0 0.0
    %80 = vmatpush1.msra.mxu0 %v57
    %81 = vmatprep.subr.mxu0 0.0
    %82 = vmatpush1.msra.mxu0 %v58
    %83 = vmatprep.subr.mxu0 0.0
    %84 = vmatpush1.msra.mxu0 %v59
    %85 = vmatprep.subr.mxu0 0.0
    %86 = vmatpush1.msra.mxu0 %v60
    %87 = vmatprep.subr.mxu0 0.0
    %88 = vmatpush1.msra.mxu0 0.0
    %89 = vmatprep.subr.mxu0 0.0
    %90 = vmatpush1.msra.mxu0 0.0
    %91 = vmatprep.subr.mxu0 0.0
    %92 = vmatpush1.msra.mxu0 0.0
    %93 = vmatprep.subr.mxu0 0.0
    %94 = vmatpush1.msra.mxu0 0.0
    %95 = vmatprep.subr.mxu0 0.0
    %96 = vmatpush1.msra.mxu0 0.0
    %97 = vmatprep.subr.mxu0 0.0
    %98 = vmatpush1.msra.mxu0 0.0
    %99 = vmatprep.subr.mxu0 0.0
    %100 = vmatpush1.msra.mxu0 0.0
    %101 = vmatprep.subr.mxu0 0.0
    %102 = vmatpush1.msra.mxu0 0.0
    %103 = vmatprep.subr.mxu0 0.0
    %104 = vmatpush1.msra.mxu0 0.0
    %105 = vmatprep.subr.mxu0 0.0
    %106 = vmatpush1.msra.mxu0 0.0
    %107 = vmatprep.subr.mxu0 0.0
    %108 = vmatpush1.msra.mxu0 0.0
    %109 = vmatprep.subr.mxu0 0.0
    %110 = vmatpush1.msra.mxu0 0.0
    %111 = vmatprep.subr.mxu0 0.0
    %112 = vmatpush1.msra.mxu0 0.0
    %113 = vmatprep.subr.mxu0 0.0
    %114 = vmatpush1.msra.mxu0 0.0
    %115 = vmatprep.subr.mxu0 0.0
    %116 = vmatpush1.msra.mxu0 0.0
    %117 = vmatprep.subr.mxu0 0.0
    %118 = vmatpush1.msra.mxu0 0.0
    %119 = vmatprep.subr.mxu0 0.0
    %120 = vmatpush1.msra.mxu0 0.0
    %121 = vmatprep.subr.mxu0 0.0
    %122 = vmatpush1.msra.mxu0 0.0
    %123 = vmatprep.subr.mxu0 0.0
    %124 = vmatpush1.msra.mxu0 0.0
    %125 = vmatprep.subr.mxu0 0.0
    %126 = vmatpush1.msra.mxu0 0.0
    %127 = vmatprep.subr.mxu0 0.0
    %128 = vmatpush1.msra.mxu0 0.0
    %129 = vmatprep.subr.mxu0 0.0
    %130 = vmatpush1.msra.mxu0 0.0
    %131 = vmatprep.subr.mxu0 0.0
    %132 = vmatpush1.msra.mxu0 0.0
    %133 = vmatprep.subr.mxu0 0.0
    %134 = vmatpush1.msra.mxu0 0.0
    %135 = vmatprep.subr.mxu0 0.0
    %136 = vmatpush1.msra.mxu0 0.0
    %137 = vmatprep.subr.mxu0 0.0
    %138 = vmatpush1.msra.mxu0 0.0
    %139 = vmatprep.subr.mxu0 0.0
    %140 = vmatpush1.msra.mxu0 0.0
    %141 = vmatprep.subr.mxu0 0.0
    %142 = vmatpush1.msra.mxu0 0.0
    %143 = vmatprep.mubr.f32.mxu0 0.0
    %144 = vmatmul.mubr.f32.gmra.mrb[0].mxu0 %v74
    %v145 = vpop.f32.mrb[0].mxu0
    %v146 = vadd.f32 %v66, %v145
    %v147 = vpop.f32.mrb[0].mxu0
    %148 = vmatprep.mubr.f32.mxu0 0.0
    %149 = vmatmul.mubr.f32.gmra.mrb[0].mxu0 %v77
    %v150 = vpop.f32.mrb[0].mxu0
    %v151 = vadd.f32 %v71, %v150
    %v152 = vpop.f32.mrb[0].mxu0
    %153 = vdwg.mxu0
    %v154 = vmax.f32 %v146, 0.0
    %v155 = vmax.f32 %v151, 0.0
    %v156 = vld [vmem:[#allocation3] sm:$0x1]
    %v157 = vld [vmem:[%s5] sm:$0x1]
    %vm158 = vcmask 64512
    %v160 = vsel %vm158, %v157, 0
    %162 = vmatprep.subr.mxu0 0.0
    %163 = vmatpush1.msra.mxu0 %v154
    %164 = vmatprep.subr.mxu0 0.0
    %165 = vmatpush1.msra.mxu0 0.0
    %166 = vmatprep.subr.mxu0 0.0
    %167 = vmatpush1.msra.mxu0 0.0
    %168 = vmatprep.subr.mxu0 0.0
    %169 = vmatpush1.msra.mxu0 0.0
    %170 = vmatprep.subr.mxu0 0.0
    %171 = vmatpush1.msra.mxu0 0.0
    %172 = vmatprep.subr.mxu0 0.0
    %173 = vmatpush1.msra.mxu0 0.0
    %174 = vmatprep.subr.mxu0 0.0
    %175 = vmatpush1.msra.mxu0 0.0
    %176 = vmatprep.subr.mxu0 0.0
    %177 = vmatpush1.msra.mxu0 0.0
    %178 = vmatprep.subr.mxu0 0.0
    %179 = vmatpush1.msra.mxu0 0.0
    %180 = vmatprep.subr.mxu0 0.0
    %181 = vmatpush1.msra.mxu0 0.0
    %182 = vmatprep.subr.mxu0 0.0
    %183 = vmatpush1.msra.mxu0 0.0
    %184 = vmatprep.subr.mxu0 0.0
    %185 = vmatpush1.msra.mxu0 0.0
    %186 = vmatprep.subr.mxu0 0.0
    %187 = vmatpush1.msra.mxu0 0.0
    %188 = vmatprep.subr.mxu0 0.0
    %189 = vmatpush1.msra.mxu0 0.0
    %190 = vmatprep.subr.mxu0 0.0
    %191 = vmatpush1.msra.mxu0 0.0
    %192 = vmatprep.subr.mxu0 0.0
    %193 = vmatpush1.msra.mxu0 0.0
    %194 = vmatprep.subr.mxu0 0.0
    %195 = vmatpush1.msra.mxu0 0.0
    %196 = vmatprep.subr.mxu0 0.0
    %197 = vmatpush1.msra.mxu0 0.0
    %198 = vmatprep.subr.mxu0 0.0
    %199 = vmatpush1.msra.mxu0 0.0
    %200 = vmatprep.subr.mxu0 0.0
    %201 = vmatpush1.msra.mxu0 0.0
    %202 = vmatprep.subr.mxu0 0.0
    %203 = vmatpush1.msra.mxu0 0.0
    %204 = vmatprep.subr.mxu0 0.0
    %205 = vmatpush1.msra.mxu0 0.0
    %206 = vmatprep.subr.mxu0 0.0
    %207 = vmatpush1.msra.mxu0 0.0
    %208 = vmatprep.subr.mxu0 0.0
    %209 = vmatpush1.msra.mxu0 0.0
    %210 = vmatprep.subr.mxu0 0.0
    %211 = vmatpush1.msra.mxu0 0.0
    %212 = vmatprep.subr.mxu0 0.0
    %213 = vmatpush1.msra.mxu0 0.0
    %214 = vmatprep.subr.mxu0 0.0
    %215 = vmatpush1.msra.mxu0 0.0
    %216 = vmatprep.subr.mxu0 0.0
    %217 = vmatpush1.msra.mxu0 0.0
    %218 = vmatprep.subr.mxu0 0.0
    %219 = vmatpush1.msra.mxu0 0.0
    %220 = vmatprep.subr.mxu0 0.0
    %221 = vmatpush1.msra.mxu0 0.0
    %222 = vmatprep.subr.mxu0 0.0
    %223 = vmatpush1.msra.mxu0 0.0
    %224 = vmatprep.subr.mxu0 0.0
    %225 = vmatpush1.msra.mxu0 0.0
    %226 = vmatprep.mubr.f32.mxu0 0.0
    %227 = vmatmul.mubr.f32.gmra.mrb[0].mxu0 %v160
    %v228 = vpop.f32.mrb[0].mxu0
    %v229 = vadd.f32 0.0, %v228
    %v230 = vpop.f32.mrb[0].mxu0
    %231 = vdwg.mxu0
    %v232 = vadd.f32 %v156, %v229
    %233 = vst.msk [vmem:[#allocation3] sm:$0x1] %vm28, %v232
    %v234 = vmul.f32 %v155, %v33
    %235 = vst.msk [vmem:[#allocation2] sm:$0xff] %vm35, %v234
    %v236 = vmul.f32 %v155, %v40
    %237 = vst.msk [vmem:[#allocation2 + $0x8] sm:$0xff] %vm35, %v236
    %v238 = vmul.f32 %v155, %v46
    %239 = vst.msk [vmem:[#allocation2 + $0x10] sm:$0xff] %vm35, %v238
    %v240 = vmul.f32 %v155, %v52
    %241 = vst.msk [vmem:[#allocation2 + $0x18] sm:$0xff] %vm35, %v240
    %v242 = vld [vmem:[%s2] sm:$0xff]
    %v243 = vld [vmem:[#allocation2] sm:$0xff]
    %v244 = vld [vmem:[#allocation2 + $0x8] sm:$0xff]
    %v245 = vld [vmem:[#allocation2 + $0x10] sm:$0xff]
    %v246 = vld [vmem:[#allocation2 + $0x18] sm:$0xff]
    %v247 = vld [vmem:[%s4] sm:$0xff]
    %249 = vset.pattern.permute.xlu0 0
    %250 = vperm.xlu0 %249, %v247
    %v251 = vpop.permute.xlu0 %250
    %v254 = vsel %vm35, %v242, 0
    %256 = vmatprep.subr.mxu0 0.0
    %257 = vmatpush1.msra.mxu0 %v243
    %258 = vmatprep.subr.mxu0 0.0
    %259 = vmatpush1.msra.mxu0 %v244
    %260 = vmatprep.subr.mxu0 0.0
    %261 = vmatpush1.msra.mxu0 %v245
    %262 = vmatprep.subr.mxu0 0.0
    %263 = vmatpush1.msra.mxu0 %v246
    %264 = vmatprep.subr.mxu0 0.0
    %265 = vmatpush1.msra.mxu0 0.0
    %266 = vmatprep.subr.mxu0 0.0
    %267 = vmatpush1.msra.mxu0 0.0
    %268 = vmatprep.subr.mxu0 0.0
    %269 = vmatpush1.msra.mxu0 0.0
    %270 = vmatprep.subr.mxu0 0.0
    %271 = vmatpush1.msra.mxu0 0.0
    %272 = vmatprep.subr.mxu0 0.0
    %273 = vmatpush1.msra.mxu0 0.0
    %274 = vmatprep.subr.mxu0 0.0
    %275 = vmatpush1.msra.mxu0 0.0
    %276 = vmatprep.subr.mxu0 0.0
    %277 = vmatpush1.msra.mxu0 0.0
    %278 = vmatprep.subr.mxu0 0.0
    %279 = vmatpush1.msra.mxu0 0.0
    %280 = vmatprep.subr.mxu0 0.0
    %281 = vmatpush1.msra.mxu0 0.0
    %282 = vmatprep.subr.mxu0 0.0
    %283 = vmatpush1.msra.mxu0 0.0
    %284 = vmatprep.subr.mxu0 0.0
    %285 = vmatpush1.msra.mxu0 0.0
    %286 = vmatprep.subr.mxu0 0.0
    %287 = vmatpush1.msra.mxu0 0.0
    %288 = vmatprep.subr.mxu0 0.0
    %289 = vmatpush1.msra.mxu0 0.0
    %290 = vmatprep.subr.mxu0 0.0
    %291 = vmatpush1.msra.mxu0 0.0
    %292 = vmatprep.subr.mxu0 0.0
    %293 = vmatpush1.msra.mxu0 0.0
    %294 = vmatprep.subr.mxu0 0.0
    %295 = vmatpush1.msra.mxu0 0.0
    %296 = vmatprep.subr.mxu0 0.0
    %297 = vmatpush1.msra.mxu0 0.0
    %298 = vmatprep.subr.mxu0 0.0
    %299 = vmatpush1.msra.mxu0 0.0
    %300 = vmatprep.subr.mxu0 0.0
    %301 = vmatpush1.msra.mxu0 0.0
    %302 = vmatprep.subr.mxu0 0.0
    %303 = vmatpush1.msra.mxu0 0.0
    %304 = vmatprep.subr.mxu0 0.0
    %305 = vmatpush1.msra.mxu0 0.0
    %306 = vmatprep.subr.mxu0 0.0
    %307 = vmatpush1.msra.mxu0 0.0
    %308 = vmatprep.subr.mxu0 0.0
    %309 = vmatpush1.msra.mxu0 0.0
    %310 = vmatprep.subr.mxu0 0.0
    %311 = vmatpush1.msra.mxu0 0.0
    %312 = vmatprep.subr.mxu0 0.0
    %313 = vmatpush1.msra.mxu0 0.0
    %314 = vmatprep.subr.mxu0 0.0
    %315 = vmatpush1.msra.mxu0 0.0
    %316 = vmatprep.subr.mxu0 0.0
    %317 = vmatpush1.msra.mxu0 0.0
    %318 = vmatprep.subr.mxu0 0.0
    %319 = vmatpush1.msra.mxu0 0.0
    %320 = vmatprep.mubr.f32.mxu0 0.0
    %321 = vmatmul.mubr.f32.gmra.mrb[0].mxu0 %v254
    %v322 = vpop.f32.mrb[0].mxu0
    %v323 = vadd.f32 %v251, %v322
    %v324 = vpop.f32.mrb[0].mxu0
    %325 = vdwg.mxu0
    %v326 = vmax.f32 %v323, 0.0
    %v327 = vld [vmem:[#allocation3] sm:$0x1]
    %v328 = vld [vmem:[%s6] sm:$0x1]
    %v330 = vsel %vm158, %v328, 0
    %332 = vmatprep.subr.mxu0 0.0
    %333 = vmatpush1.msra.mxu0 %v326
    %334 = vmatprep.subr.mxu0 0.0
    %335 = vmatpush1.msra.mxu0 0.0
    %336 = vmatprep.subr.mxu0 0.0
    %337 = vmatpush1.msra.mxu0 0.0
    %338 = vmatprep.subr.mxu0 0.0
    %339 = vmatpush1.msra.mxu0 0.0
    %340 = vmatprep.subr.mxu0 0.0
    %341 = vmatpush1.msra.mxu0 0.0
    %342 = vmatprep.subr.mxu0 0.0
    %343 = vmatpush1.msra.mxu0 0.0
    %344 = vmatprep.subr.mxu0 0.0
    %345 = vmatpush1.msra.mxu0 0.0
    %346 = vmatprep.subr.mxu0 0.0
    %347 = vmatpush1.msra.mxu0 0.0
    %348 = vmatprep.subr.mxu0 0.0
    %349 = vmatpush1.msra.mxu0 0.0
    %350 = vmatprep.subr.mxu0 0.0
    %351 = vmatpush1.msra.mxu0 0.0
    %352 = vmatprep.subr.mxu0 0.0
    %353 = vmatpush1.msra.mxu0 0.0
    %354 = vmatprep.subr.mxu0 0.0
    %355 = vmatpush1.msra.mxu0 0.0
    %356 = vmatprep.subr.mxu0 0.0
    %357 = vmatpush1.msra.mxu0 0.0
    %358 = vmatprep.subr.mxu0 0.0
    %359 = vmatpush1.msra.mxu0 0.0
    %360 = vmatprep.subr.mxu0 0.0
    %361 = vmatpush1.msra.mxu0 0.0
    %362 = vmatprep.subr.mxu0 0.0
    %363 = vmatpush1.msra.mxu0 0.0
    %364 = vmatprep.subr.mxu0 0.0
    %365 = vmatpush1.msra.mxu0 0.0
    %366 = vmatprep.subr.mxu0 0.0
    %367 = vmatpush1.msra.mxu0 0.0
    %368 = vmatprep.subr.mxu0 0.0
    %369 = vmatpush1.msra.mxu0 0.0
    %370 = vmatprep.subr.mxu0 0.0
    %371 = vmatpush1.msra.mxu0 0.0
    %372 = vmatprep.subr.mxu0 0.0
    %373 = vmatpush1.msra.mxu0 0.0
    %374 = vmatprep.subr.mxu0 0.0
    %375 = vmatpush1.msra.mxu0 0.0
    %376 = vmatprep.subr.mxu0 0.0
    %377 = vmatpush1.msra.mxu0 0.0
    %378 = vmatprep.subr.mxu0 0.0
    %379 = vmatpush1.msra.mxu0 0.0
    %380 = vmatprep.subr.mxu0 0.0
    %381 = vmatpush1.msra.mxu0 0.0
    %382 = vmatprep.subr.mxu0 0.0
    %383 = vmatpush1.msra.mxu0 0.0
    %384 = vmatprep.subr.mxu0 0.0
    %385 = vmatpush1.msra.mxu0 0.0
    %386 = vmatprep.subr.mxu0 0.0
    %387 = vmatpush1.msra.mxu0 0.0
    %388 = vmatprep.subr.mxu0 0.0
    %389 = vmatpush1.msra.mxu0 0.0
    %390 = vmatprep.subr.mxu0 0.0
    %391 = vmatpush1.msra.mxu0 0.0
    %392 = vmatprep.subr.mxu0 0.0
    %393 = vmatpush1.msra.mxu0 0.0
    %394 = vmatprep.subr.mxu0 0.0
    %395 = vmatpush1.msra.mxu0 0.0
    %396 = vmatprep.mubr.f32.mxu0 0.0
    %397 = vmatmul.mubr.f32.gmra.mrb[0].mxu0 %v330
    %v398 = vpop.f32.mrb[0].mxu0
    %v399 = vadd.f32 0.0, %v398
    %v400 = vpop.f32.mrb[0].mxu0
    %401 = vdwg.mxu0
    %v402 = vadd.f32 %v327, %v399
    %403 = vst.msk [vmem:[#allocation3] sm:$0x1] %vm28, %v402
    // Predicated region
    $region30: #{tpu_custom_call.1} parent=1 // pred_check
      _
    $region31: #{tpu_custom_call.1} parent=1 // pred_check_branch
      %405 = sbr.rel (0) target = $region33
    $region32: #{tpu_custom_call.1} parent=1 // pred_region
      %s407 = ssub.s32 16, 16
      %408 = vsyncadd [#allocation4], %s407
      %s410 = sshll.u32 [#allocation3], 4
      %s411 = int_to_ptr.vmem [resolvable:$true] %s410
      %413 = dma.vmem_to_hbm [thread:$0]  %s411, 16, %s7, [#allocation4]
    $region33: #{tpu_custom_call.1} parent=1 // pred_fallthru
      _
    // Predicated region
    $region34: #{tpu_custom_call.1} parent=1 // pred_check
      _
    $region35: #{tpu_custom_call.1} parent=1 // pred_check_branch
      %415 = sbr.rel (0) target = $region37
    $region36: #{tpu_custom_call.1} parent=1 // pred_region
      %416 = dma.done [#allocation4], 16
    $region37: #{tpu_custom_call.1} parent=1 // pred_fallthru
      _
    %417 = vsyncpa [#allocation4], 1

</llo_original>
